<compile_context>
chip_gen: v6e
topology: v6e:2x2x1
jax: 0.10.0
libtpu: 0.0.40
codegen_flags: <defaults>
</compile_context>

<pallas_src>
import jax
import jax.numpy as jnp
from jax.experimental import pallas as pl
from jax.experimental.pallas import tpu as pltpu

_HIDDEN = 32
_LANE = 128


def _ceil_to(n, m):
    return -(-n // m) * m


def _fcv_kernel(x_ref, p_ref, out_ref):
    # Transposed layout (batch on lanes):
    #   x_ref  : (D, TB)          observations, batch on the lane axis
    #   p_ref  : (H, D + H + 4)   packed [w1 | b1 | w2 | b2 | w3 | b3] slab,
    #                             resident in VMEM (constant index_map)
    #   out_ref: (1, TB)          lane-dense value row
    xT = x_ref[...]
    D, TB = xT.shape
    H = p_ref.shape[0]

    # Layer 1: K = D (4) is far too small for the MXU -> D unrolled
    # broadcast-FMAs on the VPU, kept in f32 (v5e VPU has no bf16).
    acc = jnp.broadcast_to(p_ref[:, D:D + 1], (H, TB))          # b1
    for d in range(D):                                          # static & tiny
        acc = acc + p_ref[:, d:d + 1] * xT[d:d + 1, :]          # w1[:, d]
    h1 = jnp.maximum(acc, 0.0)

    # Layer 2: the only real matmul (32x32xTB) -> MXU with bf16 operands
    # (native MXU input width on v5e/v6e/v7x) and f32 accumulation.
    w2 = p_ref[:, D + 1:D + 1 + H].astype(jnp.bfloat16)
    h2 = jnp.dot(w2, h1.astype(jnp.bfloat16),
                 preferred_element_type=jnp.float32)
    h2 = jnp.maximum(h2 + p_ref[:, D + 1 + H:D + 2 + H], 0.0)   # b2

    # Layer 3: output dim 1 -> elementwise multiply + XLU sublane reduce
    # instead of a degenerate N=1 matmul on the MXU.
    w3 = p_ref[:, D + 2 + H:D + 3 + H]                          # (H, 1)
    b3 = p_ref[0:1, D + 3 + H:D + 4 + H]                        # (1, 1)
    out = jnp.sum(w3 * h2, axis=0, keepdims=True) + b3
    out_ref[...] = out.astype(out_ref.dtype)                    # lane-dense (1, TB)


def pack_fcv_params(params):
    """Pack (w1,b1,w2,b2,w3,b3) into one (H, D+H+4) f32 slab, done ONCE.

    Column layout: [0:D)=w1, D=b1, [D+1:D+1+H)=w2, D+1+H=b2, D+2+H=w3,
    D+3+H=b3 (replicated down the column).
    """
    w1, b1, w2, b2, w3, b3 = params
    H, D = w1.shape
    b3_col = jnp.broadcast_to(jnp.reshape(b3, (1, 1)), (H, 1))
    return jnp.concatenate([w1, b1, w2, b2, w3, b3_col], axis=1)


def fcv_forward(x, packed_params, *, batch_tile=8192):
    """Fused Pallas forward for FCV. x: (B, input_dim) f32 -> (B, 1) f32."""
    B, D = x.shape
    H, P = packed_params.shape
    assert P == D + H + 4, "packed_params does not match x's feature dim"

    # Batch lives on the lane axis.  Round the tile to a lane multiple
    # (correctness: (D, tb)/(1, tb) blocks need tb % 128 == 0), then take the
    # whole batch in ONE grid step when it fits (per-step overhead dominates
    # the work here); otherwise use the fewest balanced lane-multiple steps
    # (>= 2 steps also shards across both v7x TensorCores).
    batch_tile = _ceil_to(max(batch_tile, _LANE), _LANE)
    b_ceil = _ceil_to(B, _LANE)
    if b_ceil <= batch_tile:
        steps, tb = 1, b_ceil
    else:
        steps = pl.cdiv(b_ceil, batch_tile)
        tb = _ceil_to(pl.cdiv(b_ceil, steps), _LANE)

    # No wrapper-side pad: Pallas masks the ragged final lane tile of x and
    # the garbage lanes are sliced off below.  (Transpose stays until the
    # producer emits (D, B) directly — see TODO at top.)
    xT = x.T                                                    # (D, B)

    outT = pl.pallas_call(
        _fcv_kernel,
        out_shape=jax.ShapeDtypeStruct((1, steps * tb), jnp.float32),
        grid=(steps,),
        in_specs=[
            pl.BlockSpec((D, tb), lambda i: (0, i)),
            # Full-array block with a constant block index: DMA'd once and
            # kept resident in VMEM across the whole batch grid.
            pl.BlockSpec((H, P), lambda i: (0, 0)),
        ],
        out_specs=pl.BlockSpec((1, tb), lambda i: (0, i)),
        compiler_params=pltpu.CompilerParams(
            dimension_semantics=("parallel",)),
    )(xT, packed_params)

    # Padded lanes hold finite garbage (bias-driven, ReLU'd) — always slice.
    return outT[0, :B].reshape(B, 1)


def init_fcv_params(key, input_dim, hidden=_HIDDEN):
    """Deterministic init mimicking nn.Linear's U(-1/sqrt(fan_in), 1/sqrt(fan_in)).

    Weights are stored (out, in) like PyTorch; biases as (out, 1) columns so
    they broadcast across the lane (batch) axis inside the kernel.  w3 is a
    (hidden, 1) column for the sublane-reduce output layer.
    """
    ks = jax.random.split(key, 6)

    def linear(kw, kb, fan_in, fan_out):
        bound = 1.0 / jnp.sqrt(jnp.float32(fan_in))
        w = jax.random.uniform(kw, (fan_out, fan_in), jnp.float32, -bound, bound)
        b = jax.random.uniform(kb, (fan_out, 1), jnp.float32, -bound, bound)
        return w, b

    w1, b1 = linear(ks[0], ks[1], input_dim, hidden)   # (32, D), (32, 1)
    w2, b2 = linear(ks[2], ks[3], hidden, hidden)      # (32, 32), (32, 1)
    w3t, b3 = linear(ks[4], ks[5], hidden, 1)          # (1, 32), (1, 1)
    w3 = w3t.T                                         # (32, 1) column
    return (w1, b1, w2, b2, w3, b3)


if __name__ == "__main__":
    key = jax.random.PRNGKey(0)
    k_param, k_x = jax.random.split(key)

    input_dim = 4   # CartPole observation dim
    batch = 8

    params = init_fcv_params(k_param, input_dim)
    packed = pack_fcv_params(params)        # packed once, outside the hot loop
    x = jax.random.normal(k_x, (batch, input_dim), dtype=jnp.float32)

    out = jax.block_until_ready(fcv_forward(x, packed))

    # Pure-JAX reference (standard (B, feature) layout).  Layer 2 mirrors the
    # kernel's bf16 MXU operands; layers 1/3 stay f32 like the kernel's VPU
    # path, so the bf16 cast dominates the tolerance.
    w1, b1, w2, b2, w3, b3 = params
    h1 = jnp.maximum(x @ w1.T + b1[:, 0], 0.0)
    h2 = jnp.dot(h1.astype(jnp.bfloat16), w2.T.astype(jnp.bfloat16),
                 preferred_element_type=jnp.float32) + b2[:, 0]
    h2 = jnp.maximum(h2, 0.0)
    ref = h2 @ w3 + jnp.reshape(b3, (1, 1))

    assert out.shape == (batch, 1)
    assert jnp.allclose(out, ref, atol=1e-2, rtol=1e-2), (out, ref)

    print("KERNEL_OK")
</pallas_src>

<mosaic_0001>
module attributes {stable_mosaic.version = 11 : i64} {
  func.func @_fcv_kernel(%arg0: i32, %arg1: memref<4x128xf32, #tpu.memory_space<vmem>>, %arg2: memref<32x40xf32, #tpu.memory_space<vmem>>, %arg3: memref<1x128xf32, #tpu.memory_space<vmem>>) attributes {dimension_semantics = [#tpu.dimension_semantics<parallel>], iteration_bounds = array<i64: 1>, scalar_prefetch = 0 : i64, scratch_operands = 0 : i64, tpu.core_type = #tpu.core_type<tc>, window_params = [{transform_indices = @transform_0, window_bounds = array<i64: 4, 128>}, {pipeline_mode = #tpu.pipeline_mode<synchronous>, transform_indices = @transform_1, window_bounds = array<i64: 32, 40>}, {transform_indices = @transform_2, window_bounds = array<i64: 1, 128>}]} {
    %c0 = arith.constant 0 : index
    %c0_0 = arith.constant 0 : index
    %0 = vector.load %arg1[%c0, %c0_0] : memref<4x128xf32, #tpu.memory_space<vmem>>, vector<4x128xf32>
    %c0_1 = arith.constant 0 : index
    %c4 = arith.constant 4 : index
    %1 = vector.load %arg2[%c0_1, %c4] : memref<32x40xf32, #tpu.memory_space<vmem>>, vector<32x1xf32>
    %2 = vector.shape_cast %1 : vector<32x1xf32> to vector<32x1xf32>
    %3 = vector.broadcast %2 : vector<32x1xf32> to vector<32x128xf32>
    %c0_2 = arith.constant 0 : index
    %c0_3 = arith.constant 0 : index
    %4 = vector.load %arg2[%c0_2, %c0_3] : memref<32x40xf32, #tpu.memory_space<vmem>>, vector<32x1xf32>
    %5 = vector.extract_strided_slice %0 {offsets = [0, 0], sizes = [1, 128], strides = [1, 1]} : vector<4x128xf32> to vector<1x128xf32>
    %6 = vector.broadcast %4 : vector<32x1xf32> to vector<32x128xf32>
    %7 = vector.broadcast %5 : vector<1x128xf32> to vector<32x128xf32>
    %8 = arith.mulf %6, %7 : vector<32x128xf32>
    %9 = arith.addf %3, %8 : vector<32x128xf32>
    %c0_4 = arith.constant 0 : index
    %c1 = arith.constant 1 : index
    %10 = vector.load %arg2[%c0_4, %c1] : memref<32x40xf32, #tpu.memory_space<vmem>>, vector<32x1xf32>
    %11 = vector.extract_strided_slice %0 {offsets = [1, 0], sizes = [1, 128], strides = [1, 1]} : vector<4x128xf32> to vector<1x128xf32>
    %12 = vector.broadcast %10 : vector<32x1xf32> to vector<32x128xf32>
    %13 = vector.broadcast %11 : vector<1x128xf32> to vector<32x128xf32>
    %14 = arith.mulf %12, %13 : vector<32x128xf32>
    %15 = arith.addf %9, %14 : vector<32x128xf32>
    %c0_5 = arith.constant 0 : index
    %c2 = arith.constant 2 : index
    %16 = vector.load %arg2[%c0_5, %c2] : memref<32x40xf32, #tpu.memory_space<vmem>>, vector<32x1xf32>
    %17 = vector.extract_strided_slice %0 {offsets = [2, 0], sizes = [1, 128], strides = [1, 1]} : vector<4x128xf32> to vector<1x128xf32>
    %18 = vector.broadcast %16 : vector<32x1xf32> to vector<32x128xf32>
    %19 = vector.broadcast %17 : vector<1x128xf32> to vector<32x128xf32>
    %20 = arith.mulf %18, %19 : vector<32x128xf32>
    %21 = arith.addf %15, %20 : vector<32x128xf32>
    %c0_6 = arith.constant 0 : index
    %c3 = arith.constant 3 : index
    %22 = vector.load %arg2[%c0_6, %c3] : memref<32x40xf32, #tpu.memory_space<vmem>>, vector<32x1xf32>
    %23 = vector.extract_strided_slice %0 {offsets = [3, 0], sizes = [1, 128], strides = [1, 1]} : vector<4x128xf32> to vector<1x128xf32>
    %24 = vector.broadcast %22 : vector<32x1xf32> to vector<32x128xf32>
    %25 = vector.broadcast %23 : vector<1x128xf32> to vector<32x128xf32>
    %26 = arith.mulf %24, %25 : vector<32x128xf32>
    %27 = arith.addf %21, %26 : vector<32x128xf32>
    %cst = arith.constant 0.000000e+00 : f32
    %28 = vector.broadcast %cst : f32 to vector<32x128xf32>
    %29 = arith.maximumf %27, %28 : vector<32x128xf32>
    %c0_7 = arith.constant 0 : index
    %c5 = arith.constant 5 : index
    %30 = vector.load %arg2[%c0_7, %c5] : memref<32x40xf32, #tpu.memory_space<vmem>>, vector<32x32xf32>
    %31 = arith.truncf %30 : vector<32x32xf32> to vector<32x32xbf16>
    %32 = arith.truncf %29 : vector<32x128xf32> to vector<32x128xbf16>
    %cst_8 = arith.constant dense<0.000000e+00> : vector<32x128xf32>
    %33 = tpu.matmul %31, %32, %cst_8 {dimension_numbers = #tpu.dot_dimension_numbers<[1], [0], [0], [1], [0, 0, 1, 1], [], []>} : vector<32x32xbf16>, vector<32x128xbf16>, vector<32x128xf32> -> vector<32x128xf32>
    %c0_9 = arith.constant 0 : index
    %c37 = arith.constant 37 : index
    %34 = vector.load %arg2[%c0_9, %c37] : memref<32x40xf32, #tpu.memory_space<vmem>>, vector<32x1xf32>
    %35 = vector.broadcast %34 : vector<32x1xf32> to vector<32x128xf32>
    %36 = arith.addf %33, %35 : vector<32x128xf32>
    %cst_10 = arith.constant 0.000000e+00 : f32
    %37 = vector.broadcast %cst_10 : f32 to vector<32x128xf32>
    %38 = arith.maximumf %36, %37 : vector<32x128xf32>
    %c0_11 = arith.constant 0 : index
    %c38 = arith.constant 38 : index
    %39 = vector.load %arg2[%c0_11, %c38] : memref<32x40xf32, #tpu.memory_space<vmem>>, vector<32x1xf32>
    %c0_12 = arith.constant 0 : index
    %c39 = arith.constant 39 : index
    %40 = vector.load %arg2[%c0_12, %c39] : memref<32x40xf32, #tpu.memory_space<vmem>>, vector<1x1xf32>
    %41 = vector.broadcast %39 : vector<32x1xf32> to vector<32x128xf32>
    %42 = arith.mulf %41, %38 : vector<32x128xf32>
    %cst_13 = arith.constant dense<0.000000e+00> : vector<128xf32>
    %43 = vector.multi_reduction <add>, %42, %cst_13 [0] : vector<32x128xf32> to vector<128xf32>
    %44 = vector.shape_cast %43 : vector<128xf32> to vector<1x128xf32>
    %45 = vector.broadcast %40 : vector<1x1xf32> to vector<1x128xf32>
    %46 = arith.addf %44, %45 : vector<1x128xf32>
    %c0_14 = arith.constant 0 : index
    %c0_15 = arith.constant 0 : index
    %47 = vector.load %arg3[%c0_14, %c0_15] : memref<1x128xf32, #tpu.memory_space<vmem>>, vector<1x128xf32>
    tpu.vector_store %arg3[%c0_14, %c0_15], %46 {strides = array<i32>} : memref<1x128xf32, #tpu.memory_space<vmem>>, vector<1x128xf32>,
    return
  }
  func.func @transform_0(%arg0: i32) -> (i32, i32) {
    %c0_i32 = arith.constant 0 : i32
    %c0_i32_0 = arith.constant 0 : i32
    return %c0_i32, %arg0 : i32, i32
  }
  func.func @transform_1(%arg0: i32) -> (i32, i32) {
    %c0_i32 = arith.constant 0 : i32
    %c0_i32_0 = arith.constant 0 : i32
    %c0_i32_1 = arith.constant 0 : i32
    return %c0_i32, %c0_i32_0 : i32, i32
  }
  func.func @transform_2(%arg0: i32) -> (i32, i32) {
    %c0_i32 = arith.constant 0 : i32
    %c0_i32_0 = arith.constant 0 : i32
    return %c0_i32, %arg0 : i32, i32
  }
}

</mosaic_0001>

<llo_original>
// kernel: tpu_custom_call.1
$region0: #{tpu_custom_call.1}
  #allocation0 [shape = 'u32[]', space=smem, size = 0x4, offset = 0x4, fixed_abs, tag = 'smem constant byte address 0x4 - core index']
  #allocation1 [shape = 'u32[144,128]{1,0:T(1,128)}', space=vmem, size = 0x12000, scoped, tag = 'internal scratch']
  %s0 = inlined_call_operand.hbm [shape: f32[4,8], index: 0, kind: input, shape index: {}]
  %s1 = inlined_call_operand.hbm [shape: f32[32,40], index: 1, kind: input, shape index: {}]
  %s2 = inlined_call_operand.hbm [shape: f32[1,128], index: 2, kind: output, shape index: {}]
  %s3 = sld [smem:[#allocation0]]
  $region26: #{tpu_custom_call.1} parent=0
    _
  %s5 = ssub.s32 1, %s3
  %s6 = scalar_select 0, %s5, %s3
  $region1: #{tpu_custom_call.1} parent=0
    #allocation2 [shape = 'u8[2048]{0}', space=vmem, size = 0x800, scoped, tag = 'input window, operand 0, single buffered']
    #allocation3 [shape = 's32[1]{0}', space=sflag, size = 0x4, scoped, tag = 'scoped memory for tpu_custom_call.1']
    #allocation4 [shape = 's32[1]{0}', space=sflag, size = 0x4, scoped, tag = 'scoped memory for tpu_custom_call.1']
    #allocation5 [shape = 'u8[16384]{0}', space=vmem, size = 0x4000, scoped, tag = 'input window, operand 1, single buffered']
    #allocation6 [shape = 's32[1]{0}', space=sflag, size = 0x4, scoped, tag = 'scoped memory for tpu_custom_call.1']
    #allocation7 [shape = 'u8[512]{0}', space=vmem, size = 0x400, scoped, tag = 'output window, operand 0, single buffered']
    %7 = vsyncpa [#allocation3], 0
    %8 = vsyncpa [#allocation6], 0
    %9 = vsyncpa [#allocation4], 0
    // Predicated region
    $region2: #{tpu_custom_call.1} parent=1 // pred_check
      _
    $region3: #{tpu_custom_call.1} parent=1 // pred_check_branch
      %11 = sbr.rel (0) target = $region5
    $region4: #{tpu_custom_call.1} parent=1 // pred_region
      %s13 = ssub.s32 64, 64
      %14 = vsyncadd [#allocation3], %s13
      %s16 = sshll.u32 [#allocation2], 4
      %s17 = int_to_ptr.vmem [resolvable:$true] %s16
      %19 = dma.hbm_to_vmem [thread:$0]  %s0, 64, %s17, [#allocation3]
    $region5: #{tpu_custom_call.1} parent=1 // pred_fallthru
      _
    // Predicated region
    $region6: #{tpu_custom_call.1} parent=1 // pred_check
      _
    $region7: #{tpu_custom_call.1} parent=1 // pred_check_branch
      %21 = sbr.rel (0) target = $region9
    $region8: #{tpu_custom_call.1} parent=1 // pred_region
      %s23 = ssub.s32 512, 512
      %24 = vsyncadd [#allocation6], %s23
      %s25 = sshll.u32 [#allocation5], 4
      %s26 = int_to_ptr.vmem [resolvable:$true] %s25
      %31 = dma.hbm_to_vmem [thread:$0]  %s1, 512, %s26, [#allocation6], 128, 128, 8
    $region9: #{tpu_custom_call.1} parent=1 // pred_fallthru
      _
    // Predicated region
    $region10: #{tpu_custom_call.1} parent=1 // pred_check
      _
    $region11: #{tpu_custom_call.1} parent=1 // pred_check_branch
      %33 = sbr.rel (0) target = $region13
    $region12: #{tpu_custom_call.1} parent=1 // pred_region
      %34 = dma.done [#allocation3], 64
    $region13: #{tpu_custom_call.1} parent=1 // pred_fallthru
      _
    // Predicated region
    $region14: #{tpu_custom_call.1} parent=1 // pred_check
      _
    $region15: #{tpu_custom_call.1} parent=1 // pred_check_branch
      %36 = sbr.rel (0) target = $region17
    $region16: #{tpu_custom_call.1} parent=1 // pred_region
      %37 = dma.done [#allocation6], 512
    $region17: #{tpu_custom_call.1} parent=1 // pred_fallthru
      _
    %v39 = vld [vmem:[#allocation2] sm:$0xf]
    %v40 = vld [vmem:[#allocation5] sm:$0xff]
    %v41 = vld [vmem:[#allocation5 + $0x8] sm:$0xff]
    %v42 = vld [vmem:[#allocation5 + $0x10] sm:$0xff]
    %v43 = vld [vmem:[#allocation5 + $0x18] sm:$0xff]
    %45 = vset.pattern.permute.xlu0 4
    %46 = vperm.xlu0 %45, %v40
    %v47 = vpop.permute.xlu0 %46
    %50 = vset.pattern.permute.xlu0 4
    %51 = vperm.xlu0 %50, %v41
    %v52 = vpop.permute.xlu0 %51
    %55 = vset.pattern.permute.xlu0 4
    %56 = vperm.xlu0 %55, %v42
    %v57 = vpop.permute.xlu0 %56
    %60 = vset.pattern.permute.xlu0 4
    %61 = vperm.xlu0 %60, %v43
    %v62 = vpop.permute.xlu0 %61
    %64 = vset.pattern.permute.xlu0 0
    %65 = vperm.xlu0 %64, %v40
    %v66 = vpop.permute.xlu0 %65
    %68 = vset.pattern.permute.xlu0 0
    %69 = vperm.xlu0 %68, %v41
    %v70 = vpop.permute.xlu0 %69
    %72 = vset.pattern.permute.xlu0 0
    %73 = vperm.xlu0 %72, %v42
    %v74 = vpop.permute.xlu0 %73
    %76 = vset.pattern.permute.xlu0 0
    %77 = vperm.xlu0 %76, %v43
    %v78 = vpop.permute.xlu0 %77
    %v80 = vlaneseq
    %v81 = vshrl.u32 %v80, 7
    %v82 = vsub.s32 0, %v81
    %v83 = vrot.slane %v39, %v82
    %v84 = vmul.f32 %v66, %v83
    %v85 = vmul.f32 %v70, %v83
    %v86 = vmul.f32 %v74, %v83
    %v87 = vmul.f32 %v78, %v83
    %v88 = vadd.f32 %v47, %v84
    %v89 = vadd.f32 %v52, %v85
    %v90 = vadd.f32 %v57, %v86
    %v91 = vadd.f32 %v62, %v87
    %92 = vset.pattern.permute.xlu0 1
    %93 = vperm.xlu0 %92, %v40
    %v94 = vpop.permute.xlu0 %93
    %96 = vset.pattern.permute.xlu0 1
    %97 = vperm.xlu0 %96, %v41
    %v98 = vpop.permute.xlu0 %97
    %100 = vset.pattern.permute.xlu0 1
    %101 = vperm.xlu0 %100, %v42
    %v102 = vpop.permute.xlu0 %101
    %104 = vset.pattern.permute.xlu0 1
    %105 = vperm.xlu0 %104, %v43
    %v106 = vpop.permute.xlu0 %105
    %v108 = vlaneseq
    %v109 = vshrl.u32 %v108, 7
    %v110 = vsub.s32 1, %v109
    %v111 = vrot.slane %v39, %v110
    %v112 = vmul.f32 %v94, %v111
    %v113 = vmul.f32 %v98, %v111
    %v114 = vmul.f32 %v102, %v111
    %v115 = vmul.f32 %v106, %v111
    %v116 = vadd.f32 %v88, %v112
    %v117 = vadd.f32 %v89, %v113
    %v118 = vadd.f32 %v90, %v114
    %v119 = vadd.f32 %v91, %v115
    %120 = vset.pattern.permute.xlu0 2
    %121 = vperm.xlu0 %120, %v40
    %v122 = vpop.permute.xlu0 %121
    %124 = vset.pattern.permute.xlu0 2
    %125 = vperm.xlu0 %124, %v41
    %v126 = vpop.permute.xlu0 %125
    %128 = vset.pattern.permute.xlu0 2
    %129 = vperm.xlu0 %128, %v42
    %v130 = vpop.permute.xlu0 %129
    %132 = vset.pattern.permute.xlu0 2
    %133 = vperm.xlu0 %132, %v43
    %v134 = vpop.permute.xlu0 %133
    %v136 = vlaneseq
    %v137 = vshrl.u32 %v136, 7
    %v138 = vsub.s32 2, %v137
    %v139 = vrot.slane %v39, %v138
    %v140 = vmul.f32 %v122, %v139
    %v141 = vmul.f32 %v126, %v139
    %v142 = vmul.f32 %v130, %v139
    %v143 = vmul.f32 %v134, %v139
    %v144 = vadd.f32 %v116, %v140
    %v145 = vadd.f32 %v117, %v141
    %v146 = vadd.f32 %v118, %v142
    %v147 = vadd.f32 %v119, %v143
    %148 = vset.pattern.permute.xlu0 3
    %149 = vperm.xlu0 %148, %v40
    %v150 = vpop.permute.xlu0 %149
    %152 = vset.pattern.permute.xlu0 3
    %153 = vperm.xlu0 %152, %v41
    %v154 = vpop.permute.xlu0 %153
    %156 = vset.pattern.permute.xlu0 3
    %157 = vperm.xlu0 %156, %v42
    %v158 = vpop.permute.xlu0 %157
    %160 = vset.pattern.permute.xlu0 3
    %161 = vperm.xlu0 %160, %v43
    %v162 = vpop.permute.xlu0 %161
    %v164 = vlaneseq
    %v165 = vshrl.u32 %v164, 7
    %v166 = vsub.s32 3, %v165
    %v167 = vrot.slane %v39, %v166
    %v168 = vmul.f32 %v150, %v167
    %v169 = vmul.f32 %v154, %v167
    %v170 = vmul.f32 %v158, %v167
    %v171 = vmul.f32 %v162, %v167
    %v172 = vadd.f32 %v144, %v168
    %v173 = vadd.f32 %v145, %v169
    %v174 = vadd.f32 %v146, %v170
    %v175 = vadd.f32 %v147, %v171
    %v176 = vmax.f32 %v172, 0.0
    %v177 = vmax.f32 %v173, 0.0
    %v178 = vmax.f32 %v174, 0.0
    %v179 = vmax.f32 %v175, 0.0
    %v180 = vpack.c.bf16 %v41, %v40
    %v181 = vpack.c.bf16 %v43, %v42
    %v182 = vpack.c.bf16 %v177, %v176
    %v183 = vpack.c.bf16 %v179, %v178
    %184 = vset.pattern.permute.xlu0 37
    %185 = vperm.xlu0 %184, %v40
    %v186 = vpop.permute.xlu0 %185
    %188 = vset.pattern.permute.xlu0 37
    %189 = vperm.xlu0 %188, %v41
    %v190 = vpop.permute.xlu0 %189
    %192 = vset.pattern.permute.xlu0 37
    %193 = vperm.xlu0 %192, %v42
    %v194 = vpop.permute.xlu0 %193
    %196 = vset.pattern.permute.xlu0 37
    %197 = vperm.xlu0 %196, %v43
    %v198 = vpop.permute.xlu0 %197
    %202 = vrot.lane.b32.xlu0 %v180, 123
    %v203 = vpop.permute.xlu0 %202
    %204 = vrot.lane.b32.xlu0 %v181, 123
    %v205 = vpop.permute.xlu0 %204
    %vm206 = vcmask 261120
    %v208 = vsel %vm206, %v203, 0
    %v211 = vsel %vm206, %v205, 0
    %213 = vmatprep.subr.bf16.mxu0 0
    %214 = vmatpush1.bf16.msra.mxu0 0
    %215 = vmatprep.subr.bf16.mxu0 0
    %216 = vmatpush1.bf16.msra.mxu0 0
    %217 = vmatprep.subr.bf16.mxu0 0
    %218 = vmatpush1.bf16.msra.mxu0 0
    %219 = vmatprep.subr.bf16.mxu0 0
    %220 = vmatpush1.bf16.msra.mxu0 0
    %221 = vmatprep.subr.bf16.mxu0 0
    %222 = vmatpush1.bf16.msra.mxu0 0
    %223 = vmatprep.subr.bf16.mxu0 0
    %224 = vmatpush1.bf16.msra.mxu0 0
    %225 = vmatprep.subr.bf16.mxu0 0
    %226 = vmatpush1.bf16.msra.mxu0 %v183
    %227 = vmatprep.subr.bf16.mxu0 0
    %228 = vmatpush1.bf16.msra.mxu0 %v182
    %229 = vmatprep.subr.bf16.mxu0 0
    %230 = vmatpush2.bf16.msra.mxu0 0
    %231 = vmatprep.subr.bf16.mxu0 0
    %232 = vmatpush2.bf16.msra.mxu0 0
    %233 = vmatprep.subr.bf16.mxu0 0
    %234 = vmatpush2.bf16.msra.mxu0 0
    %235 = vmatprep.subr.bf16.mxu0 0
    %236 = vmatpush2.bf16.msra.mxu0 0
    %237 = vmatprep.subr.bf16.mxu0 0
    %238 = vmatpush2.bf16.msra.mxu0 0
    %239 = vmatprep.subr.bf16.mxu0 0
    %240 = vmatpush2.bf16.msra.mxu0 0
    %241 = vmatprep.subr.bf16.mxu0 0
    %242 = vmatpush2.bf16.msra.mxu0 0
    %243 = vmatprep.subr.bf16.mxu0 0
    %244 = vmatpush2.bf16.msra.mxu0 0
    %245 = vmatprep.mubr.bf16.mxu0 0
    %246 = vmatmul.mubr.bf16.gmra.mxu0 %v208
    %v247 = vpop.f32.mrf.mxu0
    %v248 = vadd.f32 %v186, %v247
    %v249 = vpop.f32.mrf.mxu0
    %v250 = vpop.f32.mrf.mxu0
    %v251 = vadd.f32 %v190, %v250
    %v252 = vpop.f32.mrf.mxu0
    %253 = vmatprep.mubr.bf16.mxu0 0
    %254 = vmatmul.mubr.bf16.gmra.mxu0 %v211
    %v255 = vpop.f32.mrf.mxu0
    %v256 = vadd.f32 %v194, %v255
    %v257 = vpop.f32.mrf.mxu0
    %v258 = vpop.f32.mrf.mxu0
    %v259 = vadd.f32 %v198, %v258
    %v260 = vpop.f32.mrf.mxu0
    %261 = vdwg.mxu0
    %v262 = vmax.f32 %v248, 0.0
    %v263 = vmax.f32 %v251, 0.0
    %v264 = vmax.f32 %v256, 0.0
    %v265 = vmax.f32 %v259, 0.0
    %v266 = vld [vmem:[#allocation5] sm:$0x1]
    %267 = vset.pattern.permute.xlu0 38
    %268 = vperm.xlu0 %267, %v40
    %v269 = vpop.permute.xlu0 %268
    %271 = vset.pattern.permute.xlu0 38
    %272 = vperm.xlu0 %271, %v41
    %v273 = vpop.permute.xlu0 %272
    %275 = vset.pattern.permute.xlu0 38
    %276 = vperm.xlu0 %275, %v42
    %v277 = vpop.permute.xlu0 %276
    %279 = vset.pattern.permute.xlu0 38
    %280 = vperm.xlu0 %279, %v43
    %v281 = vpop.permute.xlu0 %280
    %v283 = vmul.f32 %v269, %v262
    %v284 = vmul.f32 %v273, %v263
    %v285 = vmul.f32 %v277, %v264
    %v286 = vmul.f32 %v281, %v265
    %v287 = vadd.f32 %v283, %v284
    %v288 = vadd.f32 %v287, %v285
    %v289 = vadd.f32 %v288, %v286
    %v290 = vrot.slane %v289, 4
    %v291 = vadd.f32 %v289, %v290
    %v292 = vrot.slane %v291, 2
    %v293 = vadd.f32 %v291, %v292
    %v294 = vrot.slane %v293, 1
    %v295 = vadd.f32 %v293, %v294
    %297 = vset.pattern.permute.xlu0 39
    %298 = vperm.xlu0 %297, %v266
    %v299 = vpop.permute.xlu0 %298
    %v301 = vadd.f32 %v295, %v299
    %302 = vst [vmem:[#allocation7] sm:$0x1] %v301
    // Predicated region
    $region18: #{tpu_custom_call.1} parent=1 // pred_check
      _
    $region19: #{tpu_custom_call.1} parent=1 // pred_check_branch
      %304 = sbr.rel (0) target = $region21
    $region20: #{tpu_custom_call.1} parent=1 // pred_region
      %s306 = ssub.s32 16, 16
      %307 = vsyncadd [#allocation4], %s306
      %s309 = sshll.u32 [#allocation7], 4
      %s310 = int_to_ptr.vmem [resolvable:$true] %s309
      %312 = dma.vmem_to_hbm [thread:$0]  %s310, 16, %s2, [#allocation4]
    $region21: #{tpu_custom_call.1} parent=1 // pred_fallthru
      _
    // Predicated region
    $region22: #{tpu_custom_call.1} parent=1 // pred_check
      _
    $region23: #{tpu_custom_call.1} parent=1 // pred_check_branch
      %314 = sbr.rel (0) target = $region25
    $region24: #{tpu_custom_call.1} parent=1 // pred_region
      %315 = dma.done [#allocation4], 16
    $region25: #{tpu_custom_call.1} parent=1 // pred_fallthru
      _
    %316 = vsyncpa [#allocation3], 1
    %317 = vsyncpa [#allocation6], 1
    %318 = vsyncpa [#allocation4], 1

</llo_original>
